<compile_context>
chip_gen: v5e
topology: v5e:2x2
jax: 0.10.0
libtpu: 0.0.40
codegen_flags: <defaults>
</compile_context>

<pallas_src>
import functools

import jax
import jax.numpy as jnp
from jax import lax
from jax.experimental import pallas as pl
from jax.experimental.pallas import tpu as pltpu

NEG_SLOPE = 0.2
NEG_INF = -1e9
LANE = 128          # TPU lane width; all feature dims padded to it
ROW_TILE = 256      # target-node tile (grid axis 0, "parallel")
K_TILE = 256        # source-node tile (grid axis 1, "arbitrary"; >=256 keeps MXU fed)


def _round_up(x, m):
    return ((x + m - 1) // m) * m


def _vmem_limit_bytes():
    """Generation-aware scoped-VMEM request (v7x only has 64 MiB per TC)."""
    try:
        cap = pltpu.get_tpu_info().vmem_capacity_bytes
        return int(min(96 * 1024 * 1024, (cap * 3) // 4))
    except Exception:
        return 32 * 1024 * 1024   # safe fallback on every generation


# ---------------------------------------------------------------------------
# Kernels
# ---------------------------------------------------------------------------
def proj_kernel(x_ref, w_ref, o_ref, *, ones_col):
    """hext = x @ W_ext (bf16 x bf16 -> f32 accumulate).  A forced 1.0 column
    lets the aggregation matmul later compute the softmax row-sum for free."""
    acc = jnp.dot(x_ref[...], w_ref[...], preferred_element_type=jnp.float32)
    col = lax.broadcasted_iota(jnp.int32, acc.shape, 1)
    acc = jnp.where(col == ones_col, 1.0, acc)
    o_ref[...] = acc.astype(o_ref.dtype)


def gat_kernel(a_dst_ref, a_src_ref, adj_ref, hsrc_ref, bgat_ref, wnext_ref,
               bnext_ref, o_ref, m_sc, acc_sc, *, sum_col, ones_col):
    """One GAT layer for a (ROW_TILE x K_TILE) block of the attention matrix.

    Online softmax over the source (k) axis; at the last k-step the GAT bias,
    ReLU and the next layer's extended projection (or the final nn.Linear)
    are applied.  hsrc columns: [0:Dout]=W x, [Dout]=a_src, [Dout+1]=a_dst,
    [Dout+2]=1.0, rest zero.
    """
    k = pl.program_id(1)

    @pl.when(k == 0)
    def _():
        m_sc[...] = jnp.full_like(m_sc, NEG_INF)
        acc_sc[...] = jnp.zeros_like(acc_sc)

    # Scores for this block: leaky_relu(a_dst[i] + a_src[j]), masked by adj.
    s = a_dst_ref[...] + a_src_ref[...]                 # (TN,1)+(1,TK) -> f32
    s = jnp.maximum(s, NEG_SLOPE * s)                   # leaky ReLU
    s = jnp.where(adj_ref[...] != 0, s, NEG_INF)        # int8 edge mask

    m_prev = m_sc[...]
    m_new = jnp.maximum(m_prev, jnp.max(s, axis=-1, keepdims=True))
    alpha = jnp.exp(m_prev - m_new)
    p = jnp.exp(s - m_new)                              # (TN, TK) f32

    # bf16 operands, f32 accumulate.  The "ones" column of hsrc makes
    # acc[:, sum_col] the running softmax denominator (no XLU sum-reduce).
    acc_sc[...] = alpha * acc_sc[...] + jnp.dot(
        p.astype(hsrc_ref.dtype), hsrc_ref[...],
        preferred_element_type=jnp.float32)
    m_sc[...] = m_new

    @pl.when(k == pl.num_programs(1) - 1)
    def _():
        acc = acc_sc[...]
        inv = pl.reciprocal(acc[:, sum_col:sum_col + 1], approx=False)
        t = jnp.maximum(acc * inv + bgat_ref[...], 0.0)   # GAT bias + ReLU
        out = jnp.dot(t.astype(wnext_ref.dtype), wnext_ref[...],
                      preferred_element_type=jnp.float32) + bnext_ref[...]
        if ones_col is not None:      # re-plant the 1.0 column for next layer
            col = lax.broadcasted_iota(jnp.int32, out.shape, 1)
            out = jnp.where(col == ones_col, 1.0, out)
        o_ref[...] = out.astype(o_ref.dtype)


# ---------------------------------------------------------------------------
# pallas_call wrappers
# ---------------------------------------------------------------------------
def _proj_call(x_pad, wext, *, ones_col, vmem_limit):
    n_pad, din_pad = x_pad.shape
    kernel = functools.partial(proj_kernel, ones_col=ones_col)
    return pl.pallas_call(
        kernel,
        out_shape=jax.ShapeDtypeStruct((n_pad, LANE), jnp.bfloat16),
        grid_spec=pltpu.PrefetchScalarGridSpec(
            num_scalar_prefetch=0,
            grid=(n_pad // ROW_TILE,),
            in_specs=[pl.BlockSpec((ROW_TILE, din_pad), lambda i: (i, 0)),
                      pl.BlockSpec((din_pad, LANE), lambda i: (0, 0))],
            out_specs=pl.BlockSpec((ROW_TILE, LANE), lambda i: (i, 0)),
        ),
        compiler_params=pltpu.CompilerParams(
            dimension_semantics=("parallel",),
            vmem_limit_bytes=vmem_limit),
        cost_estimate=pl.CostEstimate(
            flops=int(2 * n_pad * din_pad * LANE),
            transcendentals=0,
            bytes_accessed=int(2 * (n_pad * din_pad + din_pad * LANE
                                    + n_pad * LANE))),
    )(x_pad, wext)


def _gat_call(a_dst, a_src, adj_pad, hext, bgat, wnext, bnext, *,
              sum_col, ones_col, out_dtype, vmem_limit):
    n_pad = hext.shape[0]
    gr, gk = n_pad // ROW_TILE, n_pad // K_TILE
    kernel = functools.partial(gat_kernel, sum_col=sum_col, ones_col=ones_col)
    out_bytes = jnp.dtype(out_dtype).itemsize
    flops = (2 * n_pad * n_pad * LANE      # p @ hsrc aggregation
             + 2 * n_pad * LANE * LANE     # fused next projection
             + 6 * n_pad * n_pad)          # attention elementwise math
    bytes_accessed = (n_pad * n_pad                    # int8 adjacency
                      + gr * n_pad * LANE * 2          # hsrc stream (bf16)
                      + n_pad * LANE * out_bytes       # output
                      + gr * n_pad * 4 + n_pad * 4     # a_src / a_dst
                      + 2 * LANE * LANE)               # wnext (bf16)
    return pl.pallas_call(
        kernel,
        out_shape=jax.ShapeDtypeStruct((n_pad, LANE), out_dtype),
        grid_spec=pltpu.PrefetchScalarGridSpec(
            num_scalar_prefetch=0,
            grid=(gr, gk),
            in_specs=[
                pl.BlockSpec((ROW_TILE, 1), lambda i, k: (i, 0)),        # a_dst
                pl.BlockSpec((1, K_TILE), lambda i, k: (0, k)),          # a_src (lane-major)
                pl.BlockSpec((ROW_TILE, K_TILE), lambda i, k: (i, k)),   # adj int8
                pl.BlockSpec((K_TILE, LANE), lambda i, k: (k, 0)),       # hsrc tile (bf16)
                pl.BlockSpec((1, LANE), lambda i, k: (0, 0)),            # GAT bias
                pl.BlockSpec((LANE, LANE), lambda i, k: (0, 0)),         # next weights
                pl.BlockSpec((1, LANE), lambda i, k: (0, 0)),            # next bias
            ],
            out_specs=pl.BlockSpec((ROW_TILE, LANE), lambda i, k: (i, 0)),
            scratch_shapes=[pltpu.VMEM((ROW_TILE, 1), jnp.float32),      # running max
                            pltpu.VMEM((ROW_TILE, LANE), jnp.float32)],  # accumulator
        ),
        compiler_params=pltpu.CompilerParams(
            dimension_semantics=("parallel", "arbitrary"),
            vmem_limit_bytes=vmem_limit),
        cost_estimate=pl.CostEstimate(
            flops=int(flops),
            transcendentals=int(n_pad * n_pad + n_pad * gk),
            bytes_accessed=int(bytes_accessed)),
    )(a_dst, a_src, adj_pad, hext, bgat, wnext, bnext)


# ---------------------------------------------------------------------------
# Parameter preparation (fold attention vectors into the weights, pad, bf16)
# ---------------------------------------------------------------------------
def _ext_weight(w, att_src, att_dst, in_pad):
    """[W | W@att_src | W@att_dst | 0...] zero-padded to (in_pad, LANE), bf16."""
    din, dout = w.shape
    assert dout + 3 <= LANE
    we = jnp.zeros((in_pad, LANE), jnp.float32)
    we = we.at[:din, :dout].set(w)
    we = we.at[:din, dout].set(w @ att_src.reshape(-1))
    we = we.at[:din, dout + 1].set(w @ att_dst.reshape(-1))
    return we.astype(jnp.bfloat16)


def _pad_bias(b):
    return jnp.zeros((1, LANE), jnp.float32).at[:, :b.shape[1]].set(b)


def prepare_params(params, size_layers):
    d0, d1, d2, d3 = size_layers
    d0_pad = _round_up(d0, LANE)
    wl_pad = (jnp.zeros((LANE, LANE), jnp.float32)
              .at[:d2, :d3].set(params["wl"]).astype(jnp.bfloat16))
    return {
        "wext0": _ext_weight(params["w0"], params["as0"], params["ad0"], d0_pad),
        "wext1": _ext_weight(params["w1"], params["as1"], params["ad1"], LANE),
        "wext2": _ext_weight(params["w2"], params["as2"], params["ad2"], LANE),
        "b0": _pad_bias(params["b0"]),
        "b1": _pad_bias(params["b1"]),
        "b2": _pad_bias(params["b2"]),
        "wl": wl_pad,
        "bl": _pad_bias(params["bl"]),
        "zeros_b": jnp.zeros((1, LANE), jnp.float32),
    }


# ---------------------------------------------------------------------------
# Forward pass
# ---------------------------------------------------------------------------
def gnn_forward(x, adj, params, size_layers):
    d0, d1, d2, d3 = size_layers
    n = x.shape[0]
    tile = max(ROW_TILE, K_TILE)
    n_pad = _round_up(max(n, 1), tile)
    d0_pad = _round_up(d0, LANE)
    vmem_limit = _vmem_limit_bytes()

    # Node features in bf16 (MXU operand); adjacency as an int8 {0,1} mask.
    x_pad = (jnp.zeros((n_pad, d0_pad), jnp.bfloat16)
             .at[:n, :d0].set(x.astype(jnp.bfloat16)))
    adj_pad = (jnp.zeros((n_pad, n_pad), jnp.int8)
               .at[:n, :n].set((adj != 0).astype(jnp.int8)))
    # Self-loops on padded rows keep their (discarded) softmax well defined.
    adj_pad = jnp.maximum(adj_pad, jnp.eye(n_pad, dtype=jnp.int8))

    p = prepare_params(params, size_layers)

    # hext_l columns: [h_l | a_src_l | a_dst_l | 1 | 0...]
    hext = _proj_call(x_pad, p["wext0"], ones_col=d1 + 2, vmem_limit=vmem_limit)

    layers = [
        # (dout of consumed hext, GAT bias, fused next weights, next bias,
        #  ones column of produced hext, output dtype)
        (d1, p["b0"], p["wext1"], p["zeros_b"], d2 + 2, jnp.bfloat16),
        (d2, p["b1"], p["wext2"], p["zeros_b"], d2 + 2, jnp.bfloat16),
        (d2, p["b2"], p["wl"],    p["bl"],      None,   jnp.float32),
    ]
    for dout, bgat, wnext, bnext, ones_col, odt in layers:
        # a_src lane-major + a_dst column: tiny one-off XLA ops per layer, so
        # the kernel never relayouts / transposes on the XLU per grid step.
        a_src = hext[:, dout].astype(jnp.float32).reshape(1, n_pad)
        a_dst = hext[:, dout + 1:dout + 2].astype(jnp.float32)
        hext = _gat_call(a_dst, a_src, adj_pad, hext, bgat, wnext, bnext,
                         sum_col=dout + 2, ones_col=ones_col,
                         out_dtype=odt, vmem_limit=vmem_limit)
    return hext[:n, :d3]


# ---------------------------------------------------------------------------
# Init / graph helpers (match torch_geometric GATConv + nn.Linear defaults)
# ---------------------------------------------------------------------------
def _glorot(key, shape):
    fan_in, fan_out = shape[0], shape[1]
    limit = (6.0 / (fan_in + fan_out)) ** 0.5
    return jax.random.uniform(key, shape, jnp.float32, -limit, limit)


def init_params(key, size_layers):
    d0, d1, d2, d3 = size_layers
    ks = jax.random.split(key, 12)
    return {
        "w0": _glorot(ks[0], (d0, d1)),
        "as0": _glorot(ks[1], (1, d1)),
        "ad0": _glorot(ks[2], (1, d1)),
        "b0": jnp.zeros((1, d1), jnp.float32),
        "w1": _glorot(ks[3], (d1, d2)),
        "as1": _glorot(ks[4], (1, d2)),
        "ad1": _glorot(ks[5], (1, d2)),
        "b1": jnp.zeros((1, d2), jnp.float32),
        "w2": _glorot(ks[6], (d2, d2)),
        "as2": _glorot(ks[7], (1, d2)),
        "ad2": _glorot(ks[8], (1, d2)),
        "b2": jnp.zeros((1, d2), jnp.float32),
        "wl": jax.random.uniform(ks[9], (d2, d3), jnp.float32,
                                 -1.0 / (d2 ** 0.5), 1.0 / (d2 ** 0.5)),
        "bl": jax.random.uniform(ks[10], (1, d3), jnp.float32,
                                 -1.0 / (d2 ** 0.5), 1.0 / (d2 ** 0.5)),
    }


def build_adj(edge_index, n):
    src, dst = edge_index[0], edge_index[1]
    adj = jnp.zeros((n, n), jnp.float32).at[dst, src].set(1.0)
    # add self loops (PyG GATConv default add_self_loops=True)
    adj = jnp.maximum(adj, jnp.eye(n, dtype=jnp.float32))
    return adj


# TODO(synk): Adam optimizer, MSELoss and checkpoint-dir handling from the
# PyTorch module are training/IO state, not part of the forward pass.

if __name__ == "__main__":
    N = 16                      # number of graph nodes
    SIZE_LAYERS = [8, 32, 32, 4]

    key = jax.random.PRNGKey(0)
    k_x, k_p = jax.random.split(key)

    # deterministic small graph: bidirectional ring over N nodes
    src = jnp.arange(N, dtype=jnp.int32)
    dst = (src + 1) % N
    edge_index = jnp.stack([jnp.concatenate([src, dst]),
                            jnp.concatenate([dst, src])], axis=0)   # [2, 2N]

    x = jax.random.normal(k_x, (N, SIZE_LAYERS[0]), jnp.float32)
    adj = build_adj(edge_index, N)
    params = init_params(k_p, SIZE_LAYERS)

    out = gnn_forward(x, adj, params, SIZE_LAYERS)
    jax.block_until_ready(out)
    assert out.shape == (N, SIZE_LAYERS[3])
    assert bool(jnp.all(jnp.isfinite(out)))
    print("KERNEL_OK")
</pallas_src>

<mosaic_0001>
module attributes {stable_mosaic.version = 11 : i64} {
  func.func @proj_kernel(%arg0: i32, %arg1: memref<256x128xbf16, #tpu.memory_space<vmem>>, %arg2: memref<128x128xbf16, #tpu.memory_space<vmem>>, %arg3: memref<256x128xbf16, #tpu.memory_space<vmem>>) attributes {dimension_semantics = [#tpu.dimension_semantics<parallel>], iteration_bounds = array<i64: 1>, scalar_prefetch = 0 : i64, scratch_operands = 0 : i64, tpu.core_type = #tpu.core_type<tc>, window_params = [{transform_indices = @transform_0, window_bounds = array<i64: 256, 128>}, {pipeline_mode = #tpu.pipeline_mode<synchronous>, transform_indices = @transform_1, window_bounds = array<i64: 128, 128>}, {transform_indices = @transform_2, window_bounds = array<i64: 256, 128>}]} {
    %c0 = arith.constant 0 : index
    %c0_0 = arith.constant 0 : index
    %0 = vector.load %arg1[%c0, %c0_0] : memref<256x128xbf16, #tpu.memory_space<vmem>>, vector<256x128xbf16>
    %c0_1 = arith.constant 0 : index
    %c0_2 = arith.constant 0 : index
    %1 = vector.load %arg2[%c0_1, %c0_2] : memref<128x128xbf16, #tpu.memory_space<vmem>>, vector<128x128xbf16>
    %cst = arith.constant dense<0.000000e+00> : vector<256x128xf32>
    %2 = tpu.matmul %0, %1, %cst {dimension_numbers = #tpu.dot_dimension_numbers<[1], [0], [0], [1], [0, 0, 1, 1], [], []>} : vector<256x128xbf16>, vector<128x128xbf16>, vector<256x128xf32> -> vector<256x128xf32>
    %3 = tpu.iota {dimensions = array<i32: 1>} : vector<256x128xi32>
    %c34_i32 = arith.constant 34 : i32
    %4 = vector.broadcast %c34_i32 : i32 to vector<256x128xi32>
    %5 = arith.cmpi eq, %3, %4 : vector<256x128xi32>
    %cst_3 = arith.constant 1.000000e+00 : f32
    %6 = vector.broadcast %cst_3 : f32 to vector<256x128xf32>
    %7 = arith.select %5, %6, %2 : vector<256x128xi1>, vector<256x128xf32>
    %8 = arith.truncf %7 : vector<256x128xf32> to vector<256x128xbf16>
    %c0_4 = arith.constant 0 : index
    %c0_5 = arith.constant 0 : index
    %9 = vector.load %arg3[%c0_4, %c0_5] : memref<256x128xbf16, #tpu.memory_space<vmem>>, vector<256x128xbf16>
    tpu.vector_store %arg3[%c0_4, %c0_5], %8 {strides = array<i32>} : memref<256x128xbf16, #tpu.memory_space<vmem>>, vector<256x128xbf16>,
    return
  }
  func.func @transform_0(%arg0: i32) -> (i32, i32) {
    %c0_i32 = arith.constant 0 : i32
    %c0_i32_0 = arith.constant 0 : i32
    return %arg0, %c0_i32 : i32, i32
  }
  func.func @transform_1(%arg0: i32) -> (i32, i32) {
    %c0_i32 = arith.constant 0 : i32
    %c0_i32_0 = arith.constant 0 : i32
    %c0_i32_1 = arith.constant 0 : i32
    return %c0_i32, %c0_i32_0 : i32, i32
  }
  func.func @transform_2(%arg0: i32) -> (i32, i32) {
    %c0_i32 = arith.constant 0 : i32
    %c0_i32_0 = arith.constant 0 : i32
    return %arg0, %c0_i32 : i32, i32
  }
}

</mosaic_0001>

<llo_original>
// kernel: tpu_custom_call.1
$region0: #{tpu_custom_call.1}
  #allocation0 [shape = 'u32[]', space=smem, size = 0x4, offset = 0x4, fixed_abs, tag = 'smem constant byte address 0x4 - core index']
  #allocation1 [shape = 'u32[72,128]{1,0:T(1,128)}', space=vmem, size = 0x9000, scoped, tag = 'internal scratch']
  %s0 = inlined_call_operand.hbm [shape: bf16[256,128], index: 0, kind: input, shape index: {}]
  %s1 = inlined_call_operand.hbm [shape: bf16[128,128], index: 1, kind: input, shape index: {}]
  %s2 = inlined_call_operand.hbm [shape: bf16[256,128], index: 2, kind: output, shape index: {}]
  %s3 = sld [smem:[#allocation0]]
  $region26: #{tpu_custom_call.1} parent=0
    _
  %s5 = ssub.s32 1, %s3
  %s6 = scalar_select 0, %s5, %s3
  $region1: #{tpu_custom_call.1} parent=0
    #allocation2 [shape = 'u8[65536]{0}', space=vmem, size = 0x10000, scoped, tag = 'input window, operand 0, single buffered']
    #allocation3 [shape = 's32[1]{0}', space=sflag, size = 0x4, scoped, tag = 'scoped memory for tpu_custom_call.1']
    #allocation4 [shape = 's32[1]{0}', space=sflag, size = 0x4, scoped, tag = 'scoped memory for tpu_custom_call.1']
    #allocation5 [shape = 'u8[32768]{0}', space=vmem, size = 0x8000, scoped, tag = 'input window, operand 1, single buffered']
    #allocation6 [shape = 's32[1]{0}', space=sflag, size = 0x4, scoped, tag = 'scoped memory for tpu_custom_call.1']
    #allocation7 [shape = 'u8[65536]{0}', space=vmem, size = 0x10000, scoped, tag = 'output window, operand 0, single buffered']
    %7 = vsyncpa [#allocation3], 0
    %8 = vsyncpa [#allocation6], 0
    %9 = vsyncpa [#allocation4], 0
    // Predicated region
    $region2: #{tpu_custom_call.1} parent=1 // pred_check
      _
    $region3: #{tpu_custom_call.1} parent=1 // pred_check_branch
      %11 = sbr.rel (0) target = $region5
    $region4: #{tpu_custom_call.1} parent=1 // pred_region
      %13 = vsyncadd [#allocation3], 0
      %s14 = sshll.u32 %s0, 4
      %s15 = int_to_ptr.hbm [resolvable:$true] %s14
      %s16 = sshll.u32 [#allocation2], 4
      %s17 = int_to_ptr.vmem [resolvable:$true] %s16
      %22 = dma.hbm_to_vmem [thread:$0]  %s15, 2048, %s17, [#allocation3], 64, 64, 4
    $region5: #{tpu_custom_call.1} parent=1 // pred_fallthru
      _
    // Predicated region
    $region6: #{tpu_custom_call.1} parent=1 // pred_check
      _
    $region7: #{tpu_custom_call.1} parent=1 // pred_check_branch
      %24 = sbr.rel (0) target = $region9
    $region8: #{tpu_custom_call.1} parent=1 // pred_region
      %26 = vsyncadd [#allocation6], 0
      %s27 = sshll.u32 %s1, 4
      %s28 = int_to_ptr.hbm [resolvable:$true] %s27
      %s29 = sshll.u32 [#allocation5], 4
      %s30 = int_to_ptr.vmem [resolvable:$true] %s29
      %35 = dma.hbm_to_vmem [thread:$0]  %s28, 1024, %s30, [#allocation6], 64, 64, 4
    $region9: #{tpu_custom_call.1} parent=1 // pred_fallthru
      _
    // Predicated region
    $region10: #{tpu_custom_call.1} parent=1 // pred_check
      _
    $region11: #{tpu_custom_call.1} parent=1 // pred_check_branch
      %37 = sbr.rel (0) target = $region13
    $region12: #{tpu_custom_call.1} parent=1 // pred_region
      %39 = dma.done [#allocation3], 2048
    $region13: #{tpu_custom_call.1} parent=1 // pred_fallthru
      _
    // Predicated region
    $region14: #{tpu_custom_call.1} parent=1 // pred_check
      _
    $region15: #{tpu_custom_call.1} parent=1 // pred_check_branch
      %41 = sbr.rel (0) target = $region17
    $region16: #{tpu_custom_call.1} parent=1 // pred_region
      %43 = dma.done [#allocation6], 1024
    $region17: #{tpu_custom_call.1} parent=1 // pred_fallthru
      _
    %v44 = vld [vmem:[#allocation2] sm:$0xf]
    %v45 = vld [vmem:[#allocation2 + $0x4] sm:$0xf]
    %v46 = vld [vmem:[#allocation2 + $0x8] sm:$0xf]
    %v47 = vld [vmem:[#allocation2 + $0xc] sm:$0xf]
    %v48 = vld [vmem:[#allocation2 + $0x10] sm:$0xf]
    %v49 = vld [vmem:[#allocation2 + $0x14] sm:$0xf]
    %v50 = vld [vmem:[#allocation2 + $0x18] sm:$0xf]
    %v51 = vld [vmem:[#allocation2 + $0x1c] sm:$0xf]
    %v52 = vld [vmem:[#allocation2 + $0x20] sm:$0xf]
    %v53 = vld [vmem:[#allocation2 + $0x24] sm:$0xf]
    %v54 = vld [vmem:[#allocation2 + $0x28] sm:$0xf]
    %v55 = vld [vmem:[#allocation2 + $0x2c] sm:$0xf]
    %v56 = vld [vmem:[#allocation2 + $0x30] sm:$0xf]
    %v57 = vld [vmem:[#allocation2 + $0x34] sm:$0xf]
    %v58 = vld [vmem:[#allocation2 + $0x38] sm:$0xf]
    %v59 = vld [vmem:[#allocation2 + $0x3c] sm:$0xf]
    %v60 = vld [vmem:[#allocation2 + $0x40] sm:$0xf]
    %v61 = vld [vmem:[#allocation2 + $0x44] sm:$0xf]
    %v62 = vld [vmem:[#allocation2 + $0x48] sm:$0xf]
    %v63 = vld [vmem:[#allocation2 + $0x4c] sm:$0xf]
    %v64 = vld [vmem:[#allocation2 + $0x50] sm:$0xf]
    %v65 = vld [vmem:[#allocation2 + $0x54] sm:$0xf]
    %v66 = vld [vmem:[#allocation2 + $0x58] sm:$0xf]
    %v67 = vld [vmem:[#allocation2 + $0x5c] sm:$0xf]
    %v68 = vld [vmem:[#allocation2 + $0x60] sm:$0xf]
    %v69 = vld [vmem:[#allocation2 + $0x64] sm:$0xf]
    %v70 = vld [vmem:[#allocation2 + $0x68] sm:$0xf]
    %v71 = vld [vmem:[#allocation2 + $0x6c] sm:$0xf]
    %v72 = vld [vmem:[#allocation2 + $0x70] sm:$0xf]
    %v73 = vld [vmem:[#allocation2 + $0x74] sm:$0xf]
    %v74 = vld [vmem:[#allocation2 + $0x78] sm:$0xf]
    %v75 = vld [vmem:[#allocation2 + $0x7c] sm:$0xf]
    %v76 = vld [vmem:[#allocation5] sm:$0xf]
    %v77 = vld [vmem:[#allocation5 + $0x4] sm:$0xf]
    %v78 = vld [vmem:[#allocation5 + $0x8] sm:$0xf]
    %v79 = vld [vmem:[#allocation5 + $0xc] sm:$0xf]
    %v80 = vld [vmem:[#allocation5 + $0x10] sm:$0xf]
    %v81 = vld [vmem:[#allocation5 + $0x14] sm:$0xf]
    %v82 = vld [vmem:[#allocation5 + $0x18] sm:$0xf]
    %v83 = vld [vmem:[#allocation5 + $0x1c] sm:$0xf]
    %v84 = vld [vmem:[#allocation5 + $0x20] sm:$0xf]
    %v85 = vld [vmem:[#allocation5 + $0x24] sm:$0xf]
    %v86 = vld [vmem:[#allocation5 + $0x28] sm:$0xf]
    %v87 = vld [vmem:[#allocation5 + $0x2c] sm:$0xf]
    %v88 = vld [vmem:[#allocation5 + $0x30] sm:$0xf]
    %v89 = vld [vmem:[#allocation5 + $0x34] sm:$0xf]
    %v90 = vld [vmem:[#allocation5 + $0x38] sm:$0xf]
    %v91 = vld [vmem:[#allocation5 + $0x3c] sm:$0xf]
    %v124 = vunpack.c.l.b16 %v44
    %v125 = vunpack.c.l.b16 %v45
    %v126 = vunpack.c.l.b16 %v46
    %v127 = vunpack.c.l.b16 %v47
    %v128 = vunpack.c.l.b16 %v48
    %v129 = vunpack.c.l.b16 %v49
    %v130 = vunpack.c.l.b16 %v50
    %v131 = vunpack.c.l.b16 %v51
    %v132 = vunpack.c.l.b16 %v52
    %v133 = vunpack.c.l.b16 %v53
    %v134 = vunpack.c.l.b16 %v54
    %v135 = vunpack.c.l.b16 %v55
    %v136 = vunpack.c.l.b16 %v56
    %v137 = vunpack.c.l.b16 %v57
    %v138 = vunpack.c.l.b16 %v58
    %v139 = vunpack.c.l.b16 %v59
    %v140 = vunpack.c.l.b16 %v60
    %v141 = vunpack.c.l.b16 %v61
    %v142 = vunpack.c.l.b16 %v62
    %v143 = vunpack.c.l.b16 %v63
    %v144 = vunpack.c.l.b16 %v64
    %v145 = vunpack.c.l.b16 %v65
    %v146 = vunpack.c.l.b16 %v66
    %v147 = vunpack.c.l.b16 %v67
    %v148 = vunpack.c.l.b16 %v68
    %v149 = vunpack.c.l.b16 %v69
    %v150 = vunpack.c.l.b16 %v70
    %v151 = vunpack.c.l.b16 %v71
    %v152 = vunpack.c.l.b16 %v72
    %v153 = vunpack.c.l.b16 %v73
    %v154 = vunpack.c.l.b16 %v74
    %v155 = vunpack.c.l.b16 %v75
    %v156 = vpack.c.b16 %v125, %v124
    %v157 = vpack.c.b16 %v127, %v126
    %v158 = vpack.c.b16 %v129, %v128
    %v159 = vpack.c.b16 %v131, %v130
    %v160 = vpack.c.b16 %v133, %v132
    %v161 = vpack.c.b16 %v135, %v134
    %v162 = vpack.c.b16 %v137, %v136
    %v163 = vpack.c.b16 %v139, %v138
    %v164 = vpack.c.b16 %v141, %v140
    %v165 = vpack.c.b16 %v143, %v142
    %v166 = vpack.c.b16 %v145, %v144
    %v167 = vpack.c.b16 %v147, %v146
    %v168 = vpack.c.b16 %v149, %v148
    %v169 = vpack.c.b16 %v151, %v150
    %v170 = vpack.c.b16 %v153, %v152
    %v171 = vpack.c.b16 %v155, %v154
    %v204 = vunpack.c.l.b16 %v76
    %v205 = vunpack.c.l.b16 %v77
    %v206 = vunpack.c.l.b16 %v78
    %v207 = vunpack.c.l.b16 %v79
    %v208 = vunpack.c.l.b16 %v80
    %v209 = vunpack.c.l.b16 %v81
    %v210 = vunpack.c.l.b16 %v82
    %v211 = vunpack.c.l.b16 %v83
    %v212 = vunpack.c.l.b16 %v84
    %v213 = vunpack.c.l.b16 %v85
    %v214 = vunpack.c.l.b16 %v86
    %v215 = vunpack.c.l.b16 %v87
    %v216 = vunpack.c.l.b16 %v88
    %v217 = vunpack.c.l.b16 %v89
    %v218 = vunpack.c.l.b16 %v90
    %v219 = vunpack.c.l.b16 %v91
    %v220 = vpack.c.b16 %v205, %v204
    %v221 = vpack.c.b16 %v207, %v206
    %v222 = vpack.c.b16 %v209, %v208
    %v223 = vpack.c.b16 %v211, %v210
    %v224 = vpack.c.b16 %v213, %v212
    %v225 = vpack.c.b16 %v215, %v214
    %v226 = vpack.c.b16 %v217, %v216
    %v227 = vpack.c.b16 %v219, %v218
    %236 = vmatpush.bf16.msra.mxu0 %v227
    %237 = vmatpush.bf16.msra.mxu0 %v226
    %238 = vmatpush.bf16.msra.mxu0 %v225
    %239 = vmatpush.bf16.msra.mxu0 %v224
    %240 = vmatpush.bf16.msra.mxu0 %v223
    %241 = vmatpush.bf16.msra.mxu0 %v222
    %242 = vmatpush.bf16.msra.mxu0 %v221
    %243 = vmatpush.bf16.msra.mxu0 %v220
    %244 = vmatmul.bf16.gmra.mxu0 %v156
    %v245 = vpop.f32.mrf.mxu0
    %v246 = vadd.f32 0.0, %v245
    %v247 = vpop.f32.mrf.mxu0
    %v248 = vadd.f32 0.0, %v247
    %249 = vmatmul.bf16.gmra.mxu0 %v157
    %v250 = vpop.f32.mrf.mxu0
    %v251 = vadd.f32 0.0, %v250
    %v252 = vpop.f32.mrf.mxu0
    %v253 = vadd.f32 0.0, %v252
    %254 = vmatmul.bf16.gmra.mxu0 %v158
    %v255 = vpop.f32.mrf.mxu0
    %v256 = vadd.f32 0.0, %v255
    %v257 = vpop.f32.mrf.mxu0
    %v258 = vadd.f32 0.0, %v257
    %259 = vmatmul.bf16.gmra.mxu0 %v159
    %v260 = vpop.f32.mrf.mxu0
    %v261 = vadd.f32 0.0, %v260
    %v262 = vpop.f32.mrf.mxu0
    %v263 = vadd.f32 0.0, %v262
    %264 = vmatmul.bf16.gmra.mxu0 %v160
    %v265 = vpop.f32.mrf.mxu0
    %v266 = vadd.f32 0.0, %v265
    %v267 = vpop.f32.mrf.mxu0
    %v268 = vadd.f32 0.0, %v267
    %269 = vmatmul.bf16.gmra.mxu0 %v161
    %v270 = vpop.f32.mrf.mxu0
    %v271 = vadd.f32 0.0, %v270
    %v272 = vpop.f32.mrf.mxu0
    %v273 = vadd.f32 0.0, %v272
    %274 = vmatmul.bf16.gmra.mxu0 %v162
    %v275 = vpop.f32.mrf.mxu0
    %v276 = vadd.f32 0.0, %v275
    %v277 = vpop.f32.mrf.mxu0
    %v278 = vadd.f32 0.0, %v277
    %279 = vmatmul.bf16.gmra.mxu0 %v163
    %v280 = vpop.f32.mrf.mxu0
    %v281 = vadd.f32 0.0, %v280
    %v282 = vpop.f32.mrf.mxu0
    %v283 = vadd.f32 0.0, %v282
    %284 = vmatmul.bf16.gmra.mxu0 %v164
    %v285 = vpop.f32.mrf.mxu0
    %v286 = vadd.f32 0.0, %v285
    %v287 = vpop.f32.mrf.mxu0
    %v288 = vadd.f32 0.0, %v287
    %289 = vmatmul.bf16.gmra.mxu0 %v165
    %v290 = vpop.f32.mrf.mxu0
    %v291 = vadd.f32 0.0, %v290
    %v292 = vpop.f32.mrf.mxu0
    %v293 = vadd.f32 0.0, %v292
    %294 = vmatmul.bf16.gmra.mxu0 %v166
    %v295 = vpop.f32.mrf.mxu0
    %v296 = vadd.f32 0.0, %v295
    %v297 = vpop.f32.mrf.mxu0
    %v298 = vadd.f32 0.0, %v297
    %299 = vmatmul.bf16.gmra.mxu0 %v167
    %v300 = vpop.f32.mrf.mxu0
    %v301 = vadd.f32 0.0, %v300
    %v302 = vpop.f32.mrf.mxu0
    %v303 = vadd.f32 0.0, %v302
    %304 = vmatmul.bf16.gmra.mxu0 %v168
    %v305 = vpop.f32.mrf.mxu0
    %v306 = vadd.f32 0.0, %v305
    %v307 = vpop.f32.mrf.mxu0
    %v308 = vadd.f32 0.0, %v307
    %309 = vmatmul.bf16.gmra.mxu0 %v169
    %v310 = vpop.f32.mrf.mxu0
    %v311 = vadd.f32 0.0, %v310
    %v312 = vpop.f32.mrf.mxu0
    %v313 = vadd.f32 0.0, %v312
    %314 = vmatmul.bf16.gmra.mxu0 %v170
    %v315 = vpop.f32.mrf.mxu0
    %v316 = vadd.f32 0.0, %v315
    %v317 = vpop.f32.mrf.mxu0
    %v318 = vadd.f32 0.0, %v317
    %319 = vmatmul.bf16.gmra.mxu0 %v171
    %v320 = vpop.f32.mrf.mxu0
    %v321 = vadd.f32 0.0, %v320
    %v322 = vpop.f32.mrf.mxu0
    %v323 = vadd.f32 0.0, %v322
    %324 = vdwg.mxu0
    %v325 = vlaneseq
    %v326 = vand.u32 %v325, 127
    %vm327 = vcmp.eq.s32.totalorder %v326, 34
    %v328 = vsel %vm327, 1.0, %v246
    %v329 = vsel %vm327, 1.0, %v248
    %v330 = vsel %vm327, 1.0, %v251
    %v331 = vsel %vm327, 1.0, %v253
    %v332 = vsel %vm327, 1.0, %v256
    %v333 = vsel %vm327, 1.0, %v258
    %v334 = vsel %vm327, 1.0, %v261
    %v335 = vsel %vm327, 1.0, %v263
    %v336 = vsel %vm327, 1.0, %v266
    %v337 = vsel %vm327, 1.0, %v268
    %v338 = vsel %vm327, 1.0, %v271
    %v339 = vsel %vm327, 1.0, %v273
    %v340 = vsel %vm327, 1.0, %v276
    %v341 = vsel %vm327, 1.0, %v278
    %v342 = vsel %vm327, 1.0, %v281
    %v343 = vsel %vm327, 1.0, %v283
    %v344 = vsel %vm327, 1.0, %v286
    %v345 = vsel %vm327, 1.0, %v288
    %v346 = vsel %vm327, 1.0, %v291
    %v347 = vsel %vm327, 1.0, %v293
    %v348 = vsel %vm327, 1.0, %v296
    %v349 = vsel %vm327, 1.0, %v298
    %v350 = vsel %vm327, 1.0, %v301
    %v351 = vsel %vm327, 1.0, %v303
    %v352 = vsel %vm327, 1.0, %v306
    %v353 = vsel %vm327, 1.0, %v308
    %v354 = vsel %vm327, 1.0, %v311
    %v355 = vsel %vm327, 1.0, %v313
    %v356 = vsel %vm327, 1.0, %v316
    %v357 = vsel %vm327, 1.0, %v318
    %v358 = vsel %vm327, 1.0, %v321
    %v359 = vsel %vm327, 1.0, %v323
    %v360 = vpack.c.bf16 %v328, %v328
    %v361 = vpack.c.bf16 %v329, %v329
    %v362 = vpack.c.bf16 %v330, %v330
    %v363 = vpack.c.bf16 %v331, %v331
    %v364 = vpack.c.bf16 %v332, %v332
    %v365 = vpack.c.bf16 %v333, %v333
    %v366 = vpack.c.bf16 %v334, %v334
    %v367 = vpack.c.bf16 %v335, %v335
    %v368 = vpack.c.bf16 %v336, %v336
    %v369 = vpack.c.bf16 %v337, %v337
    %v370 = vpack.c.bf16 %v338, %v338
    %v371 = vpack.c.bf16 %v339, %v339
    %v372 = vpack.c.bf16 %v340, %v340
    %v373 = vpack.c.bf16 %v341, %v341
    %v374 = vpack.c.bf16 %v342, %v342
    %v375 = vpack.c.bf16 %v343, %v343
    %v376 = vpack.c.bf16 %v344, %v344
    %v377 = vpack.c.bf16 %v345, %v345
    %v378 = vpack.c.bf16 %v346, %v346
    %v379 = vpack.c.bf16 %v347, %v347
    %v380 = vpack.c.bf16 %v348, %v348
    %v381 = vpack.c.bf16 %v349, %v349
    %v382 = vpack.c.bf16 %v350, %v350
    %v383 = vpack.c.bf16 %v351, %v351
    %v384 = vpack.c.bf16 %v352, %v352
    %v385 = vpack.c.bf16 %v353, %v353
    %v386 = vpack.c.bf16 %v354, %v354
    %v387 = vpack.c.bf16 %v355, %v355
    %v388 = vpack.c.bf16 %v356, %v356
    %v389 = vpack.c.bf16 %v357, %v357
    %v390 = vpack.c.bf16 %v358, %v358
    %v391 = vpack.c.bf16 %v359, %v359
    %392 = vst [vmem:[#allocation7] sm:$0xf] %v360
    %393 = vst [vmem:[#allocation7 + $0x4] sm:$0xf] %v361
    %394 = vst [vmem:[#allocation7 + $0x8] sm:$0xf] %v362
    %395 = vst [vmem:[#allocation7 + $0xc] sm:$0xf] %v363
    %396 = vst [vmem:[#allocation7 + $0x10] sm:$0xf] %v364
    %397 = vst [vmem:[#allocation7 + $0x14] sm:$0xf] %v365
    %398 = vst [vmem:[#allocation7 + $0x18] sm:$0xf] %v366
    %399 = vst [vmem:[#allocation7 + $0x1c] sm:$0xf] %v367
    %400 = vst [vmem:[#allocation7 + $0x20] sm:$0xf] %v368
    %401 = vst [vmem:[#allocation7 + $0x24] sm:$0xf] %v369
    %402 = vst [vmem:[#allocation7 + $0x28] sm:$0xf] %v370
    %403 = vst [vmem:[#allocation7 + $0x2c] sm:$0xf] %v371
    %404 = vst [vmem:[#allocation7 + $0x30] sm:$0xf] %v372
    %405 = vst [vmem:[#allocation7 + $0x34] sm:$0xf] %v373
    %406 = vst [vmem:[#allocation7 + $0x38] sm:$0xf] %v374
    %407 = vst [vmem:[#allocation7 + $0x3c] sm:$0xf] %v375
    %408 = vst [vmem:[#allocation7 + $0x40] sm:$0xf] %v376
    %409 = vst [vmem:[#allocation7 + $0x44] sm:$0xf] %v377
    %410 = vst [vmem:[#allocation7 + $0x48] sm:$0xf] %v378
    %411 = vst [vmem:[#allocation7 + $0x4c] sm:$0xf] %v379
    %412 = vst [vmem:[#allocation7 + $0x50] sm:$0xf] %v380
    %413 = vst [vmem:[#allocation7 + $0x54] sm:$0xf] %v381
    %414 = vst [vmem:[#allocation7 + $0x58] sm:$0xf] %v382
    %415 = vst [vmem:[#allocation7 + $0x5c] sm:$0xf] %v383
    %416 = vst [vmem:[#allocation7 + $0x60] sm:$0xf] %v384
    %417 = vst [vmem:[#allocation7 + $0x64] sm:$0xf] %v385
    %418 = vst [vmem:[#allocation7 + $0x68] sm:$0xf] %v386
    %419 = vst [vmem:[#allocation7 + $0x6c] sm:$0xf] %v387
    %420 = vst [vmem:[#allocation7 + $0x70] sm:$0xf] %v388
    %421 = vst [vmem:[#allocation7 + $0x74] sm:$0xf] %v389
    %422 = vst [vmem:[#allocation7 + $0x78] sm:$0xf] %v390
    %423 = vst [vmem:[#allocation7 + $0x7c] sm:$0xf] %v391
    // Predicated region
    $region18: #{tpu_custom_call.1} parent=1 // pred_check
      _
    $region19: #{tpu_custom_call.1} parent=1 // pred_check_branch
      %425 = sbr.rel (0) target = $region21
    $region20: #{tpu_custom_call.1} parent=1 // pred_region
      %427 = vsyncadd [#allocation4], 0
      %s428 = sshll.u32 [#allocation7], 4
      %s429 = int_to_ptr.vmem [resolvable:$true] %s428
      %s430 = sshll.u32 %s2, 4
      %s431 = int_to_ptr.hbm [resolvable:$true] %s430
      %436 = dma.vmem_to_hbm [thread:$0]  %s429, 2048, %s431, [#allocation4], 64, 64, 4
    $region21: #{tpu_custom_call.1} parent=1 // pred_fallthru
      _
    // Predicated region
    $region22: #{tpu_custom_call.1} parent=1 // pred_check
      _
    $region23: #{tpu_custom_call.1} parent=1 // pred_check_branch
      %438 = sbr.rel (0) target = $region25
    $region24: #{tpu_custom_call.1} parent=1 // pred_region
      %440 = dma.done [#allocation4], 2048
    $region25: #{tpu_custom_call.1} parent=1 // pred_fallthru
      _
    %441 = vsyncpa [#allocation3], 1
    %442 = vsyncpa [#allocation6], 1
    %443 = vsyncpa [#allocation4], 1

</llo_original>
